<compile_context>
chip_gen: v6e
topology: v6e:2x2x1
jax: 0.10.0
libtpu: 0.0.40
codegen_flags: <defaults>
</compile_context>

<pallas_src>
import jax
import jax.numpy as jnp
from jax import lax
from jax.experimental import pallas as pl
from jax.experimental.pallas import tpu as pltpu

_SUBLANES = 8
_LANES = 128


def _cdiv(a, b):
    return -(-a // b)


def _round_up(n, m):
    return ((n + m - 1) // m) * m


def _linear_sigmoid_kernel(x_ref, w8_ref, b_ref, o_ref):
    """o[0, r] = sigmoid(sum_k x[r, k] * w[k] + b), lane-dense result.

    x_ref : (TB, IN) f32 VMEM   batch-tile rows
    w8_ref: (8, IN)  f32 VMEM   weight row replicated on 8 sublanes
    b_ref : (1,)     f32 SMEM   scalar bias
    o_ref : (1, TB)  f32 VMEM   lane-major per-row outputs
    """
    # MXU "NT" contraction (same dimension numbers as q @ k^T in flash attention):
    # (8, IN) . (TB, IN)^T -> (8, TB).  All 8 rows identical (replicated weight).
    z8 = lax.dot_general(
        w8_ref[...], x_ref[...],
        dimension_numbers=(((1,), (1,)), ((), ())),
        preferred_element_type=jnp.float32,
        precision=lax.Precision.HIGHEST,
    )
    z = z8[0:1, :] + b_ref[0]                         # (1, TB), lane-dense
    o_ref[...] = jax.nn.sigmoid(z).astype(o_ref.dtype)


def _balanced_tiles(B, tile_b):
    """Pick (num_tiles, rows_per_tile) with an even grid (v7x 2-TC balance)."""
    num_tiles = _cdiv(B, tile_b)
    if num_tiles > 1 and num_tiles % 2 == 1:
        num_tiles += 1
    tb = _round_up(_cdiv(B, num_tiles), _LANES)       # lane-multiple rows per tile
    num_tiles = _cdiv(B, tb)
    return num_tiles, tb


def final_layer_2(x, weight, bias, *, tile_b=8192):
    """x: (B, 50) f32, weight: (1, 50) f32 (PyTorch layout), bias: (1,) f32."""
    B, IN = x.shape
    OUT, IN_w = weight.shape
    assert OUT == 1 and IN_w == IN

    x = x.astype(jnp.float32)
    # Replicate the single weight row across 8 sublanes (1.6 KB; done once in XLA).
    w8 = jnp.broadcast_to(weight.astype(jnp.float32), (_SUBLANES, IN))
    b1 = bias.astype(jnp.float32).reshape((OUT,))     # scalar for SMEM

    if B <= tile_b:
        # Gridless path: one full-array block per operand, no pipeline overhead.
        y_row = pl.pallas_call(
            _linear_sigmoid_kernel,
            out_shape=jax.ShapeDtypeStruct((1, B), jnp.float32),
            in_specs=[
                pl.BlockSpec(memory_space=pltpu.MemorySpace.VMEM),   # x
                pl.BlockSpec(memory_space=pltpu.MemorySpace.VMEM),   # w8
                pl.BlockSpec(memory_space=pltpu.MemorySpace.SMEM),   # bias scalar
            ],
            out_specs=pl.BlockSpec(memory_space=pltpu.MemorySpace.VMEM),
        )(x, w8, b1)
        return y_row.reshape(B, OUT)

    # Batch-tiled path: HBM-read-bound on x; big row tiles, lane-dense output slab.
    num_tiles, tb = _balanced_tiles(B, tile_b)
    padded = num_tiles * tb
    y_row = pl.pallas_call(
        _linear_sigmoid_kernel,
        out_shape=jax.ShapeDtypeStruct((1, padded), jnp.float32),
        grid=(num_tiles,),
        in_specs=[
            pl.BlockSpec((tb, IN), lambda i: (i, 0)),                # x row tile
            pl.BlockSpec((_SUBLANES, IN), lambda i: (0, 0)),         # weight (resident)
            pl.BlockSpec(memory_space=pltpu.MemorySpace.SMEM),       # bias scalar
        ],
        out_specs=pl.BlockSpec((1, tb), lambda i: (0, i)),           # lane-dense slab
        compiler_params=pltpu.CompilerParams(
            dimension_semantics=("parallel",)),
    )(x, w8, b1)
    # (1, padded) row-major == padded contiguous floats; free reshape + ragged trim.
    return y_row.reshape(padded, 1)[:B]


def _reference(x, weight, bias):
    z = lax.dot_general(
        x, weight, dimension_numbers=(((1,), (1,)), ((), ())),
        preferred_element_type=jnp.float32,
        precision=lax.Precision.HIGHEST,
    ) + bias
    return jax.nn.sigmoid(z)


if __name__ == "__main__":
    key = jax.random.PRNGKey(0)
    k_x, k_w, k_b, k_x2 = jax.random.split(key, 4)

    IN, OUT = 50, 1
    # Deterministic PyTorch-style Linear init: U(-1/sqrt(in), 1/sqrt(in))
    bound = 1.0 / jnp.sqrt(jnp.float32(IN))
    weight = jax.random.uniform(k_w, (OUT, IN), jnp.float32, -bound, bound)
    bias = jax.random.uniform(k_b, (OUT,), jnp.float32, -bound, bound)

    # --- small batch (module's natural shape): gridless path ---
    B = 8
    x_small = jax.random.normal(k_x, (B, IN), jnp.float32)
    y_small = jax.block_until_ready(final_layer_2(x_small, weight, bias))
    assert y_small.shape == (B, OUT)
    assert jnp.allclose(y_small, _reference(x_small, weight, bias),
                        atol=2e-5, rtol=1e-5)

    # --- large batch: tiled path (even grid, ragged last tile) ---
    B_big = 20000
    x_big = jax.random.normal(k_x2, (B_big, IN), jnp.float32)
    y_big = jax.block_until_ready(final_layer_2(x_big, weight, bias))
    assert y_big.shape == (B_big, OUT)
    assert jnp.allclose(y_big, _reference(x_big, weight, bias),
                        atol=2e-5, rtol=1e-5)

    print("KERNEL_OK")
</pallas_src>

<mosaic_0001>
module attributes {stable_mosaic.version = 11 : i64} {
  func.func @_linear_sigmoid_kernel(%arg0: memref<8x50xf32, #tpu.memory_space<vmem>>, %arg1: memref<8x50xf32, #tpu.memory_space<vmem>>, %arg2: memref<1xf32, #tpu.memory_space<smem>>, %arg3: memref<1x8xf32, #tpu.memory_space<vmem>>) attributes {dimension_semantics = [], scalar_prefetch = 0 : i64, scratch_operands = 0 : i64, tpu.core_type = #tpu.core_type<tc>} {
    %c0 = arith.constant 0 : index
    %c0_0 = arith.constant 0 : index
    %0 = vector.load %arg1[%c0, %c0_0] : memref<8x50xf32, #tpu.memory_space<vmem>>, vector<8x50xf32>
    %c0_1 = arith.constant 0 : index
    %c0_2 = arith.constant 0 : index
    %1 = vector.load %arg0[%c0_1, %c0_2] : memref<8x50xf32, #tpu.memory_space<vmem>>, vector<8x50xf32>
    %cst = arith.constant dense<0.000000e+00> : vector<8x8xf32>
    %2 = tpu.matmul %0, %1, %cst {dimension_numbers = #tpu.dot_dimension_numbers<[1], [1], [0], [0], [0, 0, 1, 0], [], []>, precision = #tpu.contract_precision<fp32>} : vector<8x50xf32>, vector<8x50xf32>, vector<8x8xf32> -> vector<8x8xf32>
    %3 = vector.extract_strided_slice %2 {offsets = [0, 0], sizes = [1, 8], strides = [1, 1]} : vector<8x8xf32> to vector<1x8xf32>
    %c0_3 = arith.constant 0 : index
    %4 = memref.load %arg2[%c0_3] : memref<1xf32, #tpu.memory_space<smem>>
    %5 = vector.broadcast %4 : f32 to vector<1x8xf32>
    %6 = arith.addf %3, %5 : vector<1x8xf32>
    %7 = arith.negf %6 : vector<1x8xf32>
    %8 = math.exp %7 : vector<1x8xf32>
    %cst_4 = arith.constant 1.000000e+00 : f32
    %9 = vector.broadcast %cst_4 : f32 to vector<1x8xf32>
    %10 = arith.addf %9, %8 : vector<1x8xf32>
    %11 = arith.divf %9, %10 : vector<1x8xf32>
    %c0_5 = arith.constant 0 : index
    %c0_6 = arith.constant 0 : index
    %12 = vector.load %arg3[%c0_5, %c0_6] : memref<1x8xf32, #tpu.memory_space<vmem>>, vector<1x8xf32>
    tpu.vector_store %arg3[%c0_5, %c0_6], %11 {strides = array<i32>} : memref<1x8xf32, #tpu.memory_space<vmem>>, vector<1x8xf32>,
    return
  }
}

</mosaic_0001>

<llo_original>
// kernel: tpu_custom_call.1
$region0: #{tpu_custom_call.1}
  #allocation0 [shape = 'u32[]', space=smem, size = 0x4, offset = 0x4, fixed_abs, tag = 'smem constant byte address 0x4 - core index']
  #allocation1 [shape = 'u32[144,128]{1,0:T(1,128)}', space=vmem, size = 0x12000, scoped, tag = 'internal scratch']
  #allocation2 [shape = 'f32[1]{0:T(128)S(6)}', space=smem, size = 0x200, scoped, tag = 'scoped memory for tpu_custom_call.1']
  %s0 = inlined_call_operand.hbm [shape: f32[8,50], index: 0, kind: input, shape index: {}]
  %s1 = inlined_call_operand.hbm [shape: f32[8,50], index: 1, kind: input, shape index: {}]
  %s2 = inlined_call_operand.<no memory space> [shape: f32[1], index: 2, kind: input, shape index: {}]
  %s3 = inlined_call_operand.hbm [shape: f32[1,8], index: 3, kind: output, shape index: {}]
  %s4 = sld [smem:[#allocation0]]
  $region30: #{tpu_custom_call.1} parent=0
    _
  %s6 = ssub.s32 1, %s4
  %s7 = scalar_select 0, %s6, %s4
  %8 = sst [smem:[#allocation2]] %s2
  $region1: #{tpu_custom_call.1} parent=0
    #allocation3 [shape = 'u8[4096]{0}', space=vmem, size = 0x1000, scoped, tag = 'input window, operand 0, single buffered']
    #allocation4 [shape = 's32[1]{0}', space=sflag, size = 0x4, scoped, tag = 'scoped memory for tpu_custom_call.1']
    #allocation5 [shape = 's32[1]{0}', space=sflag, size = 0x4, scoped, tag = 'scoped memory for tpu_custom_call.1']
    #allocation6 [shape = 'u8[4096]{0}', space=vmem, size = 0x1000, scoped, tag = 'input window, operand 1, single buffered']
    #allocation7 [shape = 's32[1]{0}', space=sflag, size = 0x4, scoped, tag = 'scoped memory for tpu_custom_call.1']
    #allocation8 [shape = 'u8[512]{0}', space=vmem, size = 0x400, scoped, tag = 'output window, operand 0, single buffered']
    %9 = vsyncpa [#allocation4], 0
    %10 = vsyncpa [#allocation7], 0
    %11 = vsyncpa [#allocation5], 0
    // Predicated region
    $region2: #{tpu_custom_call.1} parent=1 // pred_check
      _
    $region3: #{tpu_custom_call.1} parent=1 // pred_check_branch
      %13 = sbr.rel (0) target = $region5
    $region4: #{tpu_custom_call.1} parent=1 // pred_region
      %s15 = ssub.s32 128, 128
      %16 = vsyncadd [#allocation4], %s15
      %s18 = sshll.u32 [#allocation3], 4
      %s19 = int_to_ptr.vmem [resolvable:$true] %s18
      %21 = dma.hbm_to_vmem [thread:$0]  %s0, 128, %s19, [#allocation4]
    $region5: #{tpu_custom_call.1} parent=1 // pred_fallthru
      _
    // Predicated region
    $region6: #{tpu_custom_call.1} parent=1 // pred_check
      _
    $region7: #{tpu_custom_call.1} parent=1 // pred_check_branch
      %23 = sbr.rel (0) target = $region9
    $region8: #{tpu_custom_call.1} parent=1 // pred_region
      %s25 = ssub.s32 128, 128
      %26 = vsyncadd [#allocation7], %s25
      %s28 = sshll.u32 [#allocation6], 4
      %s29 = int_to_ptr.vmem [resolvable:$true] %s28
      %31 = dma.hbm_to_vmem [thread:$0]  %s1, 128, %s29, [#allocation7]
    $region9: #{tpu_custom_call.1} parent=1 // pred_fallthru
      _
    // Predicated region
    $region10: #{tpu_custom_call.1} parent=1 // pred_check
      _
    $region11: #{tpu_custom_call.1} parent=1 // pred_check_branch
      %33 = sbr.rel (0) target = $region13
    $region12: #{tpu_custom_call.1} parent=1 // pred_region
      _
    $region13: #{tpu_custom_call.1} parent=1 // pred_fallthru
      _
    // Predicated region
    $region14: #{tpu_custom_call.1} parent=1 // pred_check
      _
    $region15: #{tpu_custom_call.1} parent=1 // pred_check_branch
      %35 = sbr.rel (0) target = $region17
    $region16: #{tpu_custom_call.1} parent=1 // pred_region
      %36 = dma.done [#allocation4], 128
    $region17: #{tpu_custom_call.1} parent=1 // pred_fallthru
      _
    // Predicated region
    $region18: #{tpu_custom_call.1} parent=1 // pred_check
      _
    $region19: #{tpu_custom_call.1} parent=1 // pred_check_branch
      %38 = sbr.rel (0) target = $region21
    $region20: #{tpu_custom_call.1} parent=1 // pred_region
      %39 = dma.done [#allocation7], 128
    $region21: #{tpu_custom_call.1} parent=1 // pred_fallthru
      _
    %v40 = vld [vmem:[#allocation6] sm:$0xff]
    %v41 = vld [vmem:[#allocation3] sm:$0xff]
    %vm42 = vcmask 408576
    %v44 = vsel %vm42, %v40, 0
    %v47 = vsel %vm42, %v41, 0
    %49 = vmatprep.subr.mxu0 0.0
    %50 = vmatpush1.xpose.msra.mxu0 0.0
    %51 = vmatprep.subr.mxu0 0.0
    %52 = vmatpush1.xpose.msra.mxu0 0.0
    %53 = vmatprep.subr.mxu0 0.0
    %54 = vmatpush1.xpose.msra.mxu0 0.0
    %55 = vmatprep.subr.mxu0 0.0
    %56 = vmatpush1.xpose.msra.mxu0 0.0
    %57 = vmatprep.subr.mxu0 0.0
    %58 = vmatpush1.xpose.msra.mxu0 0.0
    %59 = vmatprep.subr.mxu0 0.0
    %60 = vmatpush1.xpose.msra.mxu0 0.0
    %61 = vmatprep.subr.mxu0 0.0
    %62 = vmatpush1.xpose.msra.mxu0 0.0
    %63 = vmatprep.subr.mxu0 0.0
    %64 = vmatpush1.xpose.msra.mxu0 0.0
    %65 = vmatprep.subr.mxu0 0.0
    %66 = vmatpush1.xpose.msra.mxu0 0.0
    %67 = vmatprep.subr.mxu0 0.0
    %68 = vmatpush1.xpose.msra.mxu0 0.0
    %69 = vmatprep.subr.mxu0 0.0
    %70 = vmatpush1.xpose.msra.mxu0 0.0
    %71 = vmatprep.subr.mxu0 0.0
    %72 = vmatpush1.xpose.msra.mxu0 0.0
    %73 = vmatprep.subr.mxu0 0.0
    %74 = vmatpush1.xpose.msra.mxu0 0.0
    %75 = vmatprep.subr.mxu0 0.0
    %76 = vmatpush1.xpose.msra.mxu0 0.0
    %77 = vmatprep.subr.mxu0 0.0
    %78 = vmatpush1.xpose.msra.mxu0 0.0
    %79 = vmatprep.subr.mxu0 0.0
    %v80 = vand.u32 %v47, 4294901760
    %81 = vmatpush1.xpose.msra.mxu0 %v80
    %82 = vmatprep.subr.mxu0 0.0
    %83 = vmatpush2.xpose.msra.mxu0 0.0
    %84 = vmatprep.subr.mxu0 0.0
    %85 = vmatpush2.xpose.msra.mxu0 0.0
    %86 = vmatprep.subr.mxu0 0.0
    %87 = vmatpush2.xpose.msra.mxu0 0.0
    %88 = vmatprep.subr.mxu0 0.0
    %89 = vmatpush2.xpose.msra.mxu0 0.0
    %90 = vmatprep.subr.mxu0 0.0
    %91 = vmatpush2.xpose.msra.mxu0 0.0
    %92 = vmatprep.subr.mxu0 0.0
    %93 = vmatpush2.xpose.msra.mxu0 0.0
    %94 = vmatprep.subr.mxu0 0.0
    %95 = vmatpush2.xpose.msra.mxu0 0.0
    %96 = vmatprep.subr.mxu0 0.0
    %97 = vmatpush2.xpose.msra.mxu0 0.0
    %98 = vmatprep.subr.mxu0 0.0
    %99 = vmatpush2.xpose.msra.mxu0 0.0
    %100 = vmatprep.subr.mxu0 0.0
    %101 = vmatpush2.xpose.msra.mxu0 0.0
    %102 = vmatprep.subr.mxu0 0.0
    %103 = vmatpush2.xpose.msra.mxu0 0.0
    %104 = vmatprep.subr.mxu0 0.0
    %105 = vmatpush2.xpose.msra.mxu0 0.0
    %106 = vmatprep.subr.mxu0 0.0
    %107 = vmatpush2.xpose.msra.mxu0 0.0
    %108 = vmatprep.subr.mxu0 0.0
    %109 = vmatpush2.xpose.msra.mxu0 0.0
    %110 = vmatprep.subr.mxu0 0.0
    %111 = vmatpush2.xpose.msra.mxu0 0.0
    %112 = vmatprep.subr.mxu0 0.0
    %113 = vmatpush2.xpose.msra.mxu0 0.0
    %114 = vmatprep.mubr.f32.mxu0 0.0
    %v115 = vand.u32 %v44, 4294901760
    %v116 = vsub.f32 %v44, %v115
    %v117 = vand.u32 %v116, 4294901760
    %v118 = vsub.f32 %v116, %v117
    %v119 = vand.u32 %v118, 4294901760
    %120 = vmatmul.mubr.f32.gmra.mxu0 %v119
    %v121 = vpop.f32.mrf.mxu0
    %v122 = vadd.f32 0.0, %v121
    %v123 = vpop.f32.mrf.mxu0
    %124 = vdwg.mxu0
    %125 = vmatprep.subr.mxu0 0.0
    %126 = vmatpush1.xpose.msra.mxu0 0.0
    %127 = vmatprep.subr.mxu0 0.0
    %128 = vmatpush1.xpose.msra.mxu0 0.0
    %129 = vmatprep.subr.mxu0 0.0
    %130 = vmatpush1.xpose.msra.mxu0 0.0
    %131 = vmatprep.subr.mxu0 0.0
    %132 = vmatpush1.xpose.msra.mxu0 0.0
    %133 = vmatprep.subr.mxu0 0.0
    %134 = vmatpush1.xpose.msra.mxu0 0.0
    %135 = vmatprep.subr.mxu0 0.0
    %136 = vmatpush1.xpose.msra.mxu0 0.0
    %137 = vmatprep.subr.mxu0 0.0
    %138 = vmatpush1.xpose.msra.mxu0 0.0
    %139 = vmatprep.subr.mxu0 0.0
    %140 = vmatpush1.xpose.msra.mxu0 0.0
    %141 = vmatprep.subr.mxu0 0.0
    %142 = vmatpush1.xpose.msra.mxu0 0.0
    %143 = vmatprep.subr.mxu0 0.0
    %144 = vmatpush1.xpose.msra.mxu0 0.0
    %145 = vmatprep.subr.mxu0 0.0
    %146 = vmatpush1.xpose.msra.mxu0 0.0
    %147 = vmatprep.subr.mxu0 0.0
    %148 = vmatpush1.xpose.msra.mxu0 0.0
    %149 = vmatprep.subr.mxu0 0.0
    %150 = vmatpush1.xpose.msra.mxu0 0.0
    %151 = vmatprep.subr.mxu0 0.0
    %152 = vmatpush1.xpose.msra.mxu0 0.0
    %153 = vmatprep.subr.mxu0 0.0
    %154 = vmatpush1.xpose.msra.mxu0 0.0
    %155 = vmatprep.subr.mxu0 0.0
    %v156 = vand.u32 %v47, 4294901760
    %v157 = vsub.f32 %v47, %v156
    %v158 = vand.u32 %v157, 4294901760
    %v159 = vsub.f32 %v157, %v158
    %v160 = vand.u32 %v159, 4294901760
    %161 = vmatpush1.xpose.msra.mxu0 %v160
    %162 = vmatprep.subr.mxu0 0.0
    %163 = vmatpush2.xpose.msra.mxu0 0.0
    %164 = vmatprep.subr.mxu0 0.0
    %165 = vmatpush2.xpose.msra.mxu0 0.0
    %166 = vmatprep.subr.mxu0 0.0
    %167 = vmatpush2.xpose.msra.mxu0 0.0
    %168 = vmatprep.subr.mxu0 0.0
    %169 = vmatpush2.xpose.msra.mxu0 0.0
    %170 = vmatprep.subr.mxu0 0.0
    %171 = vmatpush2.xpose.msra.mxu0 0.0
    %172 = vmatprep.subr.mxu0 0.0
    %173 = vmatpush2.xpose.msra.mxu0 0.0
    %174 = vmatprep.subr.mxu0 0.0
    %175 = vmatpush2.xpose.msra.mxu0 0.0
    %176 = vmatprep.subr.mxu0 0.0
    %177 = vmatpush2.xpose.msra.mxu0 0.0
    %178 = vmatprep.subr.mxu0 0.0
    %179 = vmatpush2.xpose.msra.mxu0 0.0
    %180 = vmatprep.subr.mxu0 0.0
    %181 = vmatpush2.xpose.msra.mxu0 0.0
    %182 = vmatprep.subr.mxu0 0.0
    %183 = vmatpush2.xpose.msra.mxu0 0.0
    %184 = vmatprep.subr.mxu0 0.0
    %185 = vmatpush2.xpose.msra.mxu0 0.0
    %186 = vmatprep.subr.mxu0 0.0
    %187 = vmatpush2.xpose.msra.mxu0 0.0
    %188 = vmatprep.subr.mxu0 0.0
    %189 = vmatpush2.xpose.msra.mxu0 0.0
    %190 = vmatprep.subr.mxu0 0.0
    %191 = vmatpush2.xpose.msra.mxu0 0.0
    %192 = vmatprep.subr.mxu0 0.0
    %193 = vmatpush2.xpose.msra.mxu0 0.0
    %194 = vmatprep.mubr.f32.mxu0 0.0
    %v195 = vand.u32 %v44, 4294901760
    %196 = vmatmul.mubr.f32.gmra.mxu0 %v195
    %v197 = vpop.f32.mrf.mxu0
    %v198 = vadd.f32 %v122, %v197
    %v199 = vpop.f32.mrf.mxu0
    %200 = vdwg.mxu0
    %201 = vmatprep.subr.mxu0 0.0
    %202 = vmatpush1.xpose.msra.mxu0 0.0
    %203 = vmatprep.subr.mxu0 0.0
    %204 = vmatpush1.xpose.msra.mxu0 0.0
    %205 = vmatprep.subr.mxu0 0.0
    %206 = vmatpush1.xpose.msra.mxu0 0.0
    %207 = vmatprep.subr.mxu0 0.0
    %208 = vmatpush1.xpose.msra.mxu0 0.0
    %209 = vmatprep.subr.mxu0 0.0
    %210 = vmatpush1.xpose.msra.mxu0 0.0
    %211 = vmatprep.subr.mxu0 0.0
    %212 = vmatpush1.xpose.msra.mxu0 0.0
    %213 = vmatprep.subr.mxu0 0.0
    %214 = vmatpush1.xpose.msra.mxu0 0.0
    %215 = vmatprep.subr.mxu0 0.0
    %216 = vmatpush1.xpose.msra.mxu0 0.0
    %217 = vmatprep.subr.mxu0 0.0
    %218 = vmatpush1.xpose.msra.mxu0 0.0
    %219 = vmatprep.subr.mxu0 0.0
    %220 = vmatpush1.xpose.msra.mxu0 0.0
    %221 = vmatprep.subr.mxu0 0.0
    %222 = vmatpush1.xpose.msra.mxu0 0.0
    %223 = vmatprep.subr.mxu0 0.0
    %224 = vmatpush1.xpose.msra.mxu0 0.0
    %225 = vmatprep.subr.mxu0 0.0
    %226 = vmatpush1.xpose.msra.mxu0 0.0
    %227 = vmatprep.subr.mxu0 0.0
    %228 = vmatpush1.xpose.msra.mxu0 0.0
    %229 = vmatprep.subr.mxu0 0.0
    %230 = vmatpush1.xpose.msra.mxu0 0.0
    %231 = vmatprep.subr.mxu0 0.0
    %v232 = vand.u32 %v47, 4294901760
    %v233 = vsub.f32 %v47, %v232
    %234 = vmatpush1.xpose.msra.mxu0 %v233
    %235 = vmatprep.subr.mxu0 0.0
    %236 = vmatpush2.xpose.msra.mxu0 0.0
    %237 = vmatprep.subr.mxu0 0.0
    %238 = vmatpush2.xpose.msra.mxu0 0.0
    %239 = vmatprep.subr.mxu0 0.0
    %240 = vmatpush2.xpose.msra.mxu0 0.0
    %241 = vmatprep.subr.mxu0 0.0
    %242 = vmatpush2.xpose.msra.mxu0 0.0
    %243 = vmatprep.subr.mxu0 0.0
    %244 = vmatpush2.xpose.msra.mxu0 0.0
    %245 = vmatprep.subr.mxu0 0.0
    %246 = vmatpush2.xpose.msra.mxu0 0.0
    %247 = vmatprep.subr.mxu0 0.0
    %248 = vmatpush2.xpose.msra.mxu0 0.0
    %249 = vmatprep.subr.mxu0 0.0
    %250 = vmatpush2.xpose.msra.mxu0 0.0
    %251 = vmatprep.subr.mxu0 0.0
    %252 = vmatpush2.xpose.msra.mxu0 0.0
    %253 = vmatprep.subr.mxu0 0.0
    %254 = vmatpush2.xpose.msra.mxu0 0.0
    %255 = vmatprep.subr.mxu0 0.0
    %256 = vmatpush2.xpose.msra.mxu0 0.0
    %257 = vmatprep.subr.mxu0 0.0
    %258 = vmatpush2.xpose.msra.mxu0 0.0
    %259 = vmatprep.subr.mxu0 0.0
    %260 = vmatpush2.xpose.msra.mxu0 0.0
    %261 = vmatprep.subr.mxu0 0.0
    %262 = vmatpush2.xpose.msra.mxu0 0.0
    %263 = vmatprep.subr.mxu0 0.0
    %264 = vmatpush2.xpose.msra.mxu0 0.0
    %265 = vmatprep.subr.mxu0 0.0
    %266 = vmatpush2.xpose.msra.mxu0 0.0
    %267 = vmatprep.mubr.f32.mxu0 0.0
    %v268 = vand.u32 %v44, 4294901760
    %v269 = vsub.f32 %v44, %v268
    %270 = vmatmul.mubr.f32.gmra.mxu0 %v269
    %v271 = vpop.f32.mrf.mxu0
    %v272 = vadd.f32 %v198, %v271
    %v273 = vpop.f32.mrf.mxu0
    %274 = vdwg.mxu0
    %275 = vmatprep.subr.mxu0 0.0
    %276 = vmatpush1.xpose.msra.mxu0 0.0
    %277 = vmatprep.subr.mxu0 0.0
    %278 = vmatpush1.xpose.msra.mxu0 0.0
    %279 = vmatprep.subr.mxu0 0.0
    %280 = vmatpush1.xpose.msra.mxu0 0.0
    %281 = vmatprep.subr.mxu0 0.0
    %282 = vmatpush1.xpose.msra.mxu0 0.0
    %283 = vmatprep.subr.mxu0 0.0
    %284 = vmatpush1.xpose.msra.mxu0 0.0
    %285 = vmatprep.subr.mxu0 0.0
    %286 = vmatpush1.xpose.msra.mxu0 0.0
    %287 = vmatprep.subr.mxu0 0.0
    %288 = vmatpush1.xpose.msra.mxu0 0.0
    %289 = vmatprep.subr.mxu0 0.0
    %290 = vmatpush1.xpose.msra.mxu0 0.0
    %291 = vmatprep.subr.mxu0 0.0
    %292 = vmatpush1.xpose.msra.mxu0 0.0
    %293 = vmatprep.subr.mxu0 0.0
    %294 = vmatpush1.xpose.msra.mxu0 0.0
    %295 = vmatprep.subr.mxu0 0.0
    %296 = vmatpush1.xpose.msra.mxu0 0.0
    %297 = vmatprep.subr.mxu0 0.0
    %298 = vmatpush1.xpose.msra.mxu0 0.0
    %299 = vmatprep.subr.mxu0 0.0
    %300 = vmatpush1.xpose.msra.mxu0 0.0
    %301 = vmatprep.subr.mxu0 0.0
    %302 = vmatpush1.xpose.msra.mxu0 0.0
    %303 = vmatprep.subr.mxu0 0.0
    %304 = vmatpush1.xpose.msra.mxu0 0.0
    %305 = vmatprep.subr.mxu0 0.0
    %v306 = vand.u32 %v47, 4294901760
    %307 = vmatpush1.xpose.msra.mxu0 %v306
    %308 = vmatprep.subr.mxu0 0.0
    %309 = vmatpush2.xpose.msra.mxu0 0.0
    %310 = vmatprep.subr.mxu0 0.0
    %311 = vmatpush2.xpose.msra.mxu0 0.0
    %312 = vmatprep.subr.mxu0 0.0
    %313 = vmatpush2.xpose.msra.mxu0 0.0
    %314 = vmatprep.subr.mxu0 0.0
    %315 = vmatpush2.xpose.msra.mxu0 0.0
    %316 = vmatprep.subr.mxu0 0.0
    %317 = vmatpush2.xpose.msra.mxu0 0.0
    %318 = vmatprep.subr.mxu0 0.0
    %319 = vmatpush2.xpose.msra.mxu0 0.0
    %320 = vmatprep.subr.mxu0 0.0
    %321 = vmatpush2.xpose.msra.mxu0 0.0
    %322 = vmatprep.subr.mxu0 0.0
    %323 = vmatpush2.xpose.msra.mxu0 0.0
    %324 = vmatprep.subr.mxu0 0.0
    %325 = vmatpush2.xpose.msra.mxu0 0.0
    %326 = vmatprep.subr.mxu0 0.0
    %327 = vmatpush2.xpose.msra.mxu0 0.0
    %328 = vmatprep.subr.mxu0 0.0
    %329 = vmatpush2.xpose.msra.mxu0 0.0
    %330 = vmatprep.subr.mxu0 0.0
    %331 = vmatpush2.xpose.msra.mxu0 0.0
    %332 = vmatprep.subr.mxu0 0.0
    %333 = vmatpush2.xpose.msra.mxu0 0.0
    %334 = vmatprep.subr.mxu0 0.0
    %335 = vmatpush2.xpose.msra.mxu0 0.0
    %336 = vmatprep.subr.mxu0 0.0
    %337 = vmatpush2.xpose.msra.mxu0 0.0
    %338 = vmatprep.subr.mxu0 0.0
    %339 = vmatpush2.xpose.msra.mxu0 0.0
    %340 = vmatprep.mubr.f32.mxu0 0.0
    %v341 = vand.u32 %v44, 4294901760
    %v342 = vsub.f32 %v44, %v341
    %v343 = vand.u32 %v342, 4294901760
    %344 = vmatmul.mubr.f32.gmra.mxu0 %v343
    %v345 = vpop.f32.mrf.mxu0
    %v346 = vadd.f32 %v272, %v345
    %v347 = vpop.f32.mrf.mxu0
    %348 = vdwg.mxu0
    %349 = vmatprep.subr.mxu0 0.0
    %350 = vmatpush1.xpose.msra.mxu0 0.0
    %351 = vmatprep.subr.mxu0 0.0
    %352 = vmatpush1.xpose.msra.mxu0 0.0
    %353 = vmatprep.subr.mxu0 0.0
    %354 = vmatpush1.xpose.msra.mxu0 0.0
    %355 = vmatprep.subr.mxu0 0.0
    %356 = vmatpush1.xpose.msra.mxu0 0.0
    %357 = vmatprep.subr.mxu0 0.0
    %358 = vmatpush1.xpose.msra.mxu0 0.0
    %359 = vmatprep.subr.mxu0 0.0
    %360 = vmatpush1.xpose.msra.mxu0 0.0
    %361 = vmatprep.subr.mxu0 0.0
    %362 = vmatpush1.xpose.msra.mxu0 0.0
    %363 = vmatprep.subr.mxu0 0.0
    %364 = vmatpush1.xpose.msra.mxu0 0.0
    %365 = vmatprep.subr.mxu0 0.0
    %366 = vmatpush1.xpose.msra.mxu0 0.0
    %367 = vmatprep.subr.mxu0 0.0
    %368 = vmatpush1.xpose.msra.mxu0 0.0
    %369 = vmatprep.subr.mxu0 0.0
    %370 = vmatpush1.xpose.msra.mxu0 0.0
    %371 = vmatprep.subr.mxu0 0.0
    %372 = vmatpush1.xpose.msra.mxu0 0.0
    %373 = vmatprep.subr.mxu0 0.0
    %374 = vmatpush1.xpose.msra.mxu0 0.0
    %375 = vmatprep.subr.mxu0 0.0
    %376 = vmatpush1.xpose.msra.mxu0 0.0
    %377 = vmatprep.subr.mxu0 0.0
    %378 = vmatpush1.xpose.msra.mxu0 0.0
    %379 = vmatprep.subr.mxu0 0.0
    %v380 = vand.u32 %v47, 4294901760
    %v381 = vsub.f32 %v47, %v380
    %v382 = vand.u32 %v381, 4294901760
    %383 = vmatpush1.xpose.msra.mxu0 %v382
    %384 = vmatprep.subr.mxu0 0.0
    %385 = vmatpush2.xpose.msra.mxu0 0.0
    %386 = vmatprep.subr.mxu0 0.0
    %387 = vmatpush2.xpose.msra.mxu0 0.0
    %388 = vmatprep.subr.mxu0 0.0
    %389 = vmatpush2.xpose.msra.mxu0 0.0
    %390 = vmatprep.subr.mxu0 0.0
    %391 = vmatpush2.xpose.msra.mxu0 0.0
    %392 = vmatprep.subr.mxu0 0.0
    %393 = vmatpush2.xpose.msra.mxu0 0.0
    %394 = vmatprep.subr.mxu0 0.0
    %395 = vmatpush2.xpose.msra.mxu0 0.0
    %396 = vmatprep.subr.mxu0 0.0
    %397 = vmatpush2.xpose.msra.mxu0 0.0
    %398 = vmatprep.subr.mxu0 0.0
    %399 = vmatpush2.xpose.msra.mxu0 0.0
    %400 = vmatprep.subr.mxu0 0.0
    %401 = vmatpush2.xpose.msra.mxu0 0.0
    %402 = vmatprep.subr.mxu0 0.0
    %403 = vmatpush2.xpose.msra.mxu0 0.0
    %404 = vmatprep.subr.mxu0 0.0
    %405 = vmatpush2.xpose.msra.mxu0 0.0
    %406 = vmatprep.subr.mxu0 0.0
    %407 = vmatpush2.xpose.msra.mxu0 0.0
    %408 = vmatprep.subr.mxu0 0.0
    %409 = vmatpush2.xpose.msra.mxu0 0.0
    %410 = vmatprep.subr.mxu0 0.0
    %411 = vmatpush2.xpose.msra.mxu0 0.0
    %412 = vmatprep.subr.mxu0 0.0
    %413 = vmatpush2.xpose.msra.mxu0 0.0
    %414 = vmatprep.subr.mxu0 0.0
    %415 = vmatpush2.xpose.msra.mxu0 0.0
    %416 = vmatprep.mubr.f32.mxu0 0.0
    %v417 = vand.u32 %v44, 4294901760
    %418 = vmatmul.mubr.f32.gmra.mxu0 %v417
    %v419 = vpop.f32.mrf.mxu0
    %v420 = vadd.f32 %v346, %v419
    %v421 = vpop.f32.mrf.mxu0
    %422 = vdwg.mxu0
    %423 = vmatprep.subr.mxu0 0.0
    %424 = vmatpush1.xpose.msra.mxu0 0.0
    %425 = vmatprep.subr.mxu0 0.0
    %426 = vmatpush1.xpose.msra.mxu0 0.0
    %427 = vmatprep.subr.mxu0 0.0
    %428 = vmatpush1.xpose.msra.mxu0 0.0
    %429 = vmatprep.subr.mxu0 0.0
    %430 = vmatpush1.xpose.msra.mxu0 0.0
    %431 = vmatprep.subr.mxu0 0.0
    %432 = vmatpush1.xpose.msra.mxu0 0.0
    %433 = vmatprep.subr.mxu0 0.0
    %434 = vmatpush1.xpose.msra.mxu0 0.0
    %435 = vmatprep.subr.mxu0 0.0
    %436 = vmatpush1.xpose.msra.mxu0 0.0
    %437 = vmatprep.subr.mxu0 0.0
    %438 = vmatpush1.xpose.msra.mxu0 0.0
    %439 = vmatprep.subr.mxu0 0.0
    %440 = vmatpush1.xpose.msra.mxu0 0.0
    %441 = vmatprep.subr.mxu0 0.0
    %442 = vmatpush1.xpose.msra.mxu0 0.0
    %443 = vmatprep.subr.mxu0 0.0
    %444 = vmatpush1.xpose.msra.mxu0 0.0
    %445 = vmatprep.subr.mxu0 0.0
    %446 = vmatpush1.xpose.msra.mxu0 0.0
    %447 = vmatprep.subr.mxu0 0.0
    %448 = vmatpush1.xpose.msra.mxu0 0.0
    %449 = vmatprep.subr.mxu0 0.0
    %450 = vmatpush1.xpose.msra.mxu0 0.0
    %451 = vmatprep.subr.mxu0 0.0
    %452 = vmatpush1.xpose.msra.mxu0 0.0
    %453 = vmatprep.subr.mxu0 0.0
    %v454 = vand.u32 %v47, 4294901760
    %455 = vmatpush1.xpose.msra.mxu0 %v454
    %456 = vmatprep.subr.mxu0 0.0
    %457 = vmatpush2.xpose.msra.mxu0 0.0
    %458 = vmatprep.subr.mxu0 0.0
    %459 = vmatpush2.xpose.msra.mxu0 0.0
    %460 = vmatprep.subr.mxu0 0.0
    %461 = vmatpush2.xpose.msra.mxu0 0.0
    %462 = vmatprep.subr.mxu0 0.0
    %463 = vmatpush2.xpose.msra.mxu0 0.0
    %464 = vmatprep.subr.mxu0 0.0
    %465 = vmatpush2.xpose.msra.mxu0 0.0
    %466 = vmatprep.subr.mxu0 0.0
    %467 = vmatpush2.xpose.msra.mxu0 0.0
    %468 = vmatprep.subr.mxu0 0.0
    %469 = vmatpush2.xpose.msra.mxu0 0.0
    %470 = vmatprep.subr.mxu0 0.0
    %471 = vmatpush2.xpose.msra.mxu0 0.0
    %472 = vmatprep.subr.mxu0 0.0
    %473 = vmatpush2.xpose.msra.mxu0 0.0
    %474 = vmatprep.subr.mxu0 0.0
    %475 = vmatpush2.xpose.msra.mxu0 0.0
    %476 = vmatprep.subr.mxu0 0.0
    %477 = vmatpush2.xpose.msra.mxu0 0.0
    %478 = vmatprep.subr.mxu0 0.0
    %479 = vmatpush2.xpose.msra.mxu0 0.0
    %480 = vmatprep.subr.mxu0 0.0
    %481 = vmatpush2.xpose.msra.mxu0 0.0
    %482 = vmatprep.subr.mxu0 0.0
    %483 = vmatpush2.xpose.msra.mxu0 0.0
    %484 = vmatprep.subr.mxu0 0.0
    %485 = vmatpush2.xpose.msra.mxu0 0.0
    %486 = vmatprep.subr.mxu0 0.0
    %487 = vmatpush2.xpose.msra.mxu0 0.0
    %488 = vmatprep.mubr.f32.mxu0 0.0
    %v489 = vand.u32 %v44, 4294901760
    %490 = vmatmul.mubr.f32.gmra.mxu0 %v489
    %v491 = vpop.f32.mrf.mxu0
    %v492 = vadd.f32 %v420, %v491
    %v493 = vpop.f32.mrf.mxu0
    %494 = vdwg.mxu0
    %s495 = sld [smem:[#allocation2]]
    %v496 = vstv %s495
    %v497 = vadd.f32 %v492, %v496
    %v498 = vxor.u32 %v497, 2147483648
    %v499 = vmul.f32 %v498, 1.442695
    %v500 = vpow.pop %v499
    %v501 = vadd.f32 %v500, 1.0
    %v502 = vrcp.pop %v501
    %v503 = vmul.f32 1.0, %v502
    %vm504 = vcmask 57344
    %505 = vst.msk [vmem:[#allocation8] sm:$0x1] %vm504, %v503
    // Predicated region
    $region22: #{tpu_custom_call.1} parent=1 // pred_check
      _
    $region23: #{tpu_custom_call.1} parent=1 // pred_check_branch
      %507 = sbr.rel (0) target = $region25
    $region24: #{tpu_custom_call.1} parent=1 // pred_region
      %s509 = ssub.s32 16, 16
      %510 = vsyncadd [#allocation5], %s509
      %s512 = sshll.u32 [#allocation8], 4
      %s513 = int_to_ptr.vmem [resolvable:$true] %s512
      %515 = dma.vmem_to_hbm [thread:$0]  %s513, 16, %s3, [#allocation5]
    $region25: #{tpu_custom_call.1} parent=1 // pred_fallthru
      _
    // Predicated region
    $region26: #{tpu_custom_call.1} parent=1 // pred_check
      _
    $region27: #{tpu_custom_call.1} parent=1 // pred_check_branch
      %517 = sbr.rel (0) target = $region29
    $region28: #{tpu_custom_call.1} parent=1 // pred_region
      %518 = dma.done [#allocation5], 16
    $region29: #{tpu_custom_call.1} parent=1 // pred_fallthru
      _
    %519 = vsyncpa [#allocation4], 1
    %520 = vsyncpa [#allocation7], 1
    %521 = vsyncpa [#allocation5], 1

</llo_original>
